<compile_context>
chip_gen: v7x
topology: tpu7x:2x2x1
jax: 0.10.0
libtpu: 0.0.40
codegen_flags: <defaults>
</compile_context>

<pallas_src>
import jax
import jax.numpy as jnp
from jax.experimental import pallas as pl
from jax.experimental.pallas import tpu as pltpu


def _round_up(x, m):
    return (x + m - 1) // m * m


def _mlp_kernel(x_ref, w0_ref, b0_ref, w1_ref, b1_ref, w2_ref, b2_ref, o_ref):
    """Fused 3-layer MLP on one row tile; rows live on the lane axis throughout.

    x_ref : (rt, d_in)      input dtype (f32/bf16), cast to bf16 in VMEM
    w0    : (H, d_in)  bf16     b0: (H, rt)     f32   (PyTorch (out,in) layout)
    w1    : (H, H)     bf16     b1: (H, rt)     f32
    w2    : (d_out, H) bf16     b2: (d_out, rt) f32
    o_ref : (d_out, rt) f32     lane-dense output slab
    """
    x = x_ref[...].astype(jnp.bfloat16)                       # (rt, d_in)

    # Layer 0 (NT gemm): h[h, r] = sum_d W0[h, d] * x[r, d]   -> (H, rt)
    h = jnp.einsum("hd,rd->hr", w0_ref[...], x,
                   preferred_element_type=jnp.float32)
    h = jnp.maximum(h + b0_ref[...], 0.0)                     # dropout = identity (eval)

    # Layer 1 (NN gemm): rows stay on lanes.                  -> (H, rt)
    h = jnp.dot(w1_ref[...], h.astype(jnp.bfloat16),
                preferred_element_type=jnp.float32)
    h = jnp.maximum(h + b1_ref[...], 0.0)

    # Head (NN gemm) + sigmoid, lane-dense.                   -> (d_out, rt)
    logits = jnp.dot(w2_ref[...], h.astype(jnp.bfloat16),
                     preferred_element_type=jnp.float32) + b2_ref[...]
    o_ref[...] = jax.nn.sigmoid(logits).astype(o_ref.dtype)


def link_predictor_forward(x, params, *, row_tile=2048):
    """Run the fused LinkPredictor kernel (eval mode).

    x:       (N, input_dim) float32 (or bfloat16)
    params:  PyTorch layout: w0 (H, Din), b0 (H,), w1 (H, H), b1 (H,),
             w2 (Dout, H), b2 (Dout,)
    returns: (N, Dout) float32 sigmoid probabilities.
    """
    n, d_in = x.shape
    hidden = params["w0"].shape[0]
    d_out = params["w2"].shape[0]
    assert params["w0"].shape[1] == d_in

    # Tile selection:
    #   * N <= row_tile: single exact tile (block == full dims, no padding).
    #   * N  > row_tile: rt multiple of 128 (lane-dense stores); >= 2 grid steps
    #     so the "parallel" axis can feed both v7x TensorCores; ragged tail is a
    #     partial boundary block (padded reads, clipped write-back) - no jnp.pad.
    if n <= row_tile:
        rt = n
    else:
        rt = max(128, (row_tile // 128) * 128)
    num_tiles = pl.cdiv(n, rt)

    # Weights in bf16 for the MXU (f32 accumulate); biases pre-broadcast along
    # the lane (row) axis so the in-kernel bias add is a dense VPU op.
    w0 = params["w0"].astype(jnp.bfloat16)
    w1 = params["w1"].astype(jnp.bfloat16)
    w2 = params["w2"].astype(jnp.bfloat16)
    b0 = jnp.broadcast_to(params["b0"].astype(jnp.float32).reshape(hidden, 1),
                          (hidden, rt))
    b1 = jnp.broadcast_to(params["b1"].astype(jnp.float32).reshape(hidden, 1),
                          (hidden, rt))
    b2 = jnp.broadcast_to(params["b2"].astype(jnp.float32).reshape(d_out, 1),
                          (d_out, rt))

    flops = 2 * n * (d_in * hidden + hidden * hidden + hidden * d_out)
    bytes_accessed = (
        n * d_in * x.dtype.itemsize                       # streamed x
        + n * d_out * 4                                   # output (f32)
        + (hidden * d_in + hidden * hidden + d_out * hidden) * 2   # bf16 weights
        + (2 * hidden + d_out) * rt * 4                   # broadcast biases
    )

    out2d = pl.pallas_call(
        _mlp_kernel,
        out_shape=jax.ShapeDtypeStruct((d_out, n), jnp.float32),
        grid_spec=pl.GridSpec(
            grid=(num_tiles,),
            in_specs=[
                # Streamed row tile of x (last block may be partial -> padded reads).
                pl.BlockSpec((rt, d_in), lambda i: (i, 0)),
                # Weights/biases: constant index_map -> VMEM-resident, no re-DMA.
                pl.BlockSpec((hidden, d_in), lambda i: (0, 0)),
                pl.BlockSpec((hidden, rt), lambda i: (0, 0)),
                pl.BlockSpec((hidden, hidden), lambda i: (0, 0)),
                pl.BlockSpec((hidden, rt), lambda i: (0, 0)),
                pl.BlockSpec((d_out, hidden), lambda i: (0, 0)),
                pl.BlockSpec((d_out, rt), lambda i: (0, 0)),
            ],
            # Lane-dense (d_out, rt) output slab; partial last block write-back
            # is clipped to the valid lanes by Pallas.
            out_specs=pl.BlockSpec((d_out, rt), lambda i: (0, i)),
        ),
        compiler_params=pltpu.CompilerParams(
            dimension_semantics=("parallel",),
        ),
        cost_estimate=pl.CostEstimate(
            flops=flops,
            transcendentals=n * d_out,
            bytes_accessed=bytes_accessed,
        ),
    )(x, w0, b0, w1, b1, w2, b2)

    # (d_out, N) -> (N, d_out); for d_out == 1 this is effectively a reshape.
    return out2d.T


def init_params(key, input_dim, hidden_dim, output_dim):
    """Deterministic synthetic init (Kaiming-uniform-like bounds, like nn.Linear).

    Weights are kept in PyTorch (out_features, in_features) layout.
    """
    ks = jax.random.split(key, 6)

    def lin(kw, kb, fan_in, out_features, in_features):
        bound = 1.0 / jnp.sqrt(fan_in)
        w = jax.random.uniform(kw, (out_features, in_features), jnp.float32,
                               -bound, bound)
        b = jax.random.uniform(kb, (out_features,), jnp.float32, -bound, bound)
        return w, b

    w0, b0 = lin(ks[0], ks[1], input_dim, hidden_dim, input_dim)
    w1, b1 = lin(ks[2], ks[3], hidden_dim, hidden_dim, hidden_dim)
    w2, b2 = lin(ks[4], ks[5], hidden_dim, output_dim, hidden_dim)
    return {"w0": w0, "b0": b0, "w1": w1, "b1": b1, "w2": w2, "b2": b2}


def _reference_forward(x, p):
    """Pure-JAX reference mirroring the kernel's precision choices."""
    f32 = jnp.float32
    h = jnp.dot(x.astype(jnp.bfloat16), p["w0"].astype(jnp.bfloat16).T,
                preferred_element_type=f32) + p["b0"][None, :]
    h = jnp.maximum(h, 0.0)
    h = jnp.dot(h.astype(jnp.bfloat16), p["w1"].astype(jnp.bfloat16).T,
                preferred_element_type=f32) + p["b1"][None, :]
    h = jnp.maximum(h, 0.0)
    logits = jnp.dot(h.astype(jnp.bfloat16), p["w2"].astype(jnp.bfloat16).T,
                     preferred_element_type=f32) + p["b2"][None, :]
    return jax.nn.sigmoid(logits)


if __name__ == "__main__":
    # LinkPredictor(input_dim=32, hidden_dim=32, output_dim=1, num_layers=3, dropout=0.5)
    input_dim, hidden_dim, output_dim = 32, 32, 1

    key = jax.random.PRNGKey(0)
    k_x1, k_p, k_x2 = jax.random.split(key, 3)
    params = init_params(k_p, input_dim, hidden_dim, output_dim)

    # Case 1: small batch -> single exact tile (no boundary padding at all).
    batch = 16
    x = jax.random.normal(k_x1, (batch, input_dim), jnp.float32)
    out = jax.block_until_ready(link_predictor_forward(x, params))
    ref = _reference_forward(x, params)
    assert out.shape == (batch, output_dim)
    err = jnp.max(jnp.abs(out - ref))
    assert jnp.allclose(out, ref, atol=1e-2, rtol=1e-2), f"mismatch (small): {err}"

    # Case 2: multi-tile with a ragged tail -> exercises partial boundary blocks
    # (padded reads / clipped write-back) in place of the old wrapper jnp.pad.
    batch2 = 300
    x2 = jax.random.normal(k_x2, (batch2, input_dim), jnp.float32)
    out2 = jax.block_until_ready(link_predictor_forward(x2, params, row_tile=128))
    ref2 = _reference_forward(x2, params)
    assert out2.shape == (batch2, output_dim)
    err2 = jnp.max(jnp.abs(out2 - ref2))
    assert jnp.allclose(out2, ref2, atol=1e-2, rtol=1e-2), f"mismatch (tiled): {err2}"

    print("KERNEL_OK")
</pallas_src>

<mosaic_0001>
module attributes {stable_mosaic.version = 11 : i64} {
  func.func @_mlp_kernel(%arg0: i32, %arg1: memref<16x32xf32, #tpu.memory_space<vmem>>, %arg2: memref<32x32xbf16, #tpu.memory_space<vmem>>, %arg3: memref<32x16xf32, #tpu.memory_space<vmem>>, %arg4: memref<32x32xbf16, #tpu.memory_space<vmem>>, %arg5: memref<32x16xf32, #tpu.memory_space<vmem>>, %arg6: memref<1x32xbf16, #tpu.memory_space<vmem>>, %arg7: memref<1x16xf32, #tpu.memory_space<vmem>>, %arg8: memref<1x16xf32, #tpu.memory_space<vmem>>) attributes {dimension_semantics = [#tpu.dimension_semantics<parallel>], iteration_bounds = array<i64: 1>, scalar_prefetch = 0 : i64, scratch_operands = 0 : i64, tpu.core_type = #tpu.core_type<tc>, window_params = [{transform_indices = @transform_0, window_bounds = array<i64: 16, 32>}, {pipeline_mode = #tpu.pipeline_mode<synchronous>, transform_indices = @transform_1, window_bounds = array<i64: 32, 32>}, {pipeline_mode = #tpu.pipeline_mode<synchronous>, transform_indices = @transform_2, window_bounds = array<i64: 32, 16>}, {pipeline_mode = #tpu.pipeline_mode<synchronous>, transform_indices = @transform_3, window_bounds = array<i64: 32, 32>}, {pipeline_mode = #tpu.pipeline_mode<synchronous>, transform_indices = @transform_4, window_bounds = array<i64: 32, 16>}, {pipeline_mode = #tpu.pipeline_mode<synchronous>, transform_indices = @transform_5, window_bounds = array<i64: 1, 32>}, {pipeline_mode = #tpu.pipeline_mode<synchronous>, transform_indices = @transform_6, window_bounds = array<i64: 1, 16>}, {transform_indices = @transform_7, window_bounds = array<i64: 1, 16>}]} {
    %c0 = arith.constant 0 : index
    %c0_0 = arith.constant 0 : index
    %0 = vector.load %arg1[%c0, %c0_0] : memref<16x32xf32, #tpu.memory_space<vmem>>, vector<16x32xf32>
    %1 = arith.truncf %0 : vector<16x32xf32> to vector<16x32xbf16>
    %c0_1 = arith.constant 0 : index
    %c0_2 = arith.constant 0 : index
    %2 = vector.load %arg2[%c0_1, %c0_2] : memref<32x32xbf16, #tpu.memory_space<vmem>>, vector<32x32xbf16>
    "tpu.trace_start"() <{level = 10 : i32, message = "hd,rd->hr"}> : () -> ()
    %cst = arith.constant dense<0.000000e+00> : vector<32x16xf32>
    %3 = tpu.matmul %2, %1, %cst {dimension_numbers = #tpu.dot_dimension_numbers<[1], [1], [0], [0], [0, 0, 1, 0], [], []>} : vector<32x32xbf16>, vector<16x32xbf16>, vector<32x16xf32> -> vector<32x16xf32>
    "tpu.trace_stop"() : () -> ()
    %c0_3 = arith.constant 0 : index
    %c0_4 = arith.constant 0 : index
    %4 = vector.load %arg3[%c0_3, %c0_4] : memref<32x16xf32, #tpu.memory_space<vmem>>, vector<32x16xf32>
    %5 = arith.addf %3, %4 : vector<32x16xf32>
    %cst_5 = arith.constant 0.000000e+00 : f32
    %6 = vector.broadcast %cst_5 : f32 to vector<32x16xf32>
    %7 = arith.maximumf %5, %6 : vector<32x16xf32>
    %c0_6 = arith.constant 0 : index
    %c0_7 = arith.constant 0 : index
    %8 = vector.load %arg4[%c0_6, %c0_7] : memref<32x32xbf16, #tpu.memory_space<vmem>>, vector<32x32xbf16>
    %9 = arith.truncf %7 : vector<32x16xf32> to vector<32x16xbf16>
    %cst_8 = arith.constant dense<0.000000e+00> : vector<32x16xf32>
    %10 = tpu.matmul %8, %9, %cst_8 {dimension_numbers = #tpu.dot_dimension_numbers<[1], [0], [0], [1], [0, 0, 1, 1], [], []>} : vector<32x32xbf16>, vector<32x16xbf16>, vector<32x16xf32> -> vector<32x16xf32>
    %c0_9 = arith.constant 0 : index
    %c0_10 = arith.constant 0 : index
    %11 = vector.load %arg5[%c0_9, %c0_10] : memref<32x16xf32, #tpu.memory_space<vmem>>, vector<32x16xf32>
    %12 = arith.addf %10, %11 : vector<32x16xf32>
    %cst_11 = arith.constant 0.000000e+00 : f32
    %13 = vector.broadcast %cst_11 : f32 to vector<32x16xf32>
    %14 = arith.maximumf %12, %13 : vector<32x16xf32>
    %c0_12 = arith.constant 0 : index
    %c0_13 = arith.constant 0 : index
    %15 = vector.load %arg6[%c0_12, %c0_13] : memref<1x32xbf16, #tpu.memory_space<vmem>>, vector<1x32xbf16>
    %16 = arith.truncf %14 : vector<32x16xf32> to vector<32x16xbf16>
    %cst_14 = arith.constant dense<0.000000e+00> : vector<1x16xf32>
    %17 = tpu.matmul %15, %16, %cst_14 {dimension_numbers = #tpu.dot_dimension_numbers<[1], [0], [0], [1], [0, 0, 1, 1], [], []>} : vector<1x32xbf16>, vector<32x16xbf16>, vector<1x16xf32> -> vector<1x16xf32>
    %c0_15 = arith.constant 0 : index
    %c0_16 = arith.constant 0 : index
    %18 = vector.load %arg7[%c0_15, %c0_16] : memref<1x16xf32, #tpu.memory_space<vmem>>, vector<1x16xf32>
    %19 = arith.addf %17, %18 : vector<1x16xf32>
    %20 = arith.negf %19 : vector<1x16xf32>
    %21 = math.exp %20 : vector<1x16xf32>
    %cst_17 = arith.constant 1.000000e+00 : f32
    %22 = vector.broadcast %cst_17 : f32 to vector<1x16xf32>
    %23 = arith.addf %22, %21 : vector<1x16xf32>
    %24 = arith.divf %22, %23 : vector<1x16xf32>
    %c0_18 = arith.constant 0 : index
    %c0_19 = arith.constant 0 : index
    %25 = vector.load %arg8[%c0_18, %c0_19] : memref<1x16xf32, #tpu.memory_space<vmem>>, vector<1x16xf32>
    tpu.vector_store %arg8[%c0_18, %c0_19], %24 {strides = array<i32>} : memref<1x16xf32, #tpu.memory_space<vmem>>, vector<1x16xf32>,
    return
  }
  func.func @transform_0(%arg0: i32) -> (i32, i32) {
    %c0_i32 = arith.constant 0 : i32
    %c0_i32_0 = arith.constant 0 : i32
    return %arg0, %c0_i32 : i32, i32
  }
  func.func @transform_1(%arg0: i32) -> (i32, i32) {
    %c0_i32 = arith.constant 0 : i32
    %c0_i32_0 = arith.constant 0 : i32
    %c0_i32_1 = arith.constant 0 : i32
    return %c0_i32, %c0_i32_0 : i32, i32
  }
  func.func @transform_2(%arg0: i32) -> (i32, i32) {
    %c0_i32 = arith.constant 0 : i32
    %c0_i32_0 = arith.constant 0 : i32
    %c0_i32_1 = arith.constant 0 : i32
    return %c0_i32, %c0_i32_0 : i32, i32
  }
  func.func @transform_3(%arg0: i32) -> (i32, i32) {
    %c0_i32 = arith.constant 0 : i32
    %c0_i32_0 = arith.constant 0 : i32
    %c0_i32_1 = arith.constant 0 : i32
    return %c0_i32, %c0_i32_0 : i32, i32
  }
  func.func @transform_4(%arg0: i32) -> (i32, i32) {
    %c0_i32 = arith.constant 0 : i32
    %c0_i32_0 = arith.constant 0 : i32
    %c0_i32_1 = arith.constant 0 : i32
    return %c0_i32, %c0_i32_0 : i32, i32
  }
  func.func @transform_5(%arg0: i32) -> (i32, i32) {
    %c0_i32 = arith.constant 0 : i32
    %c0_i32_0 = arith.constant 0 : i32
    %c0_i32_1 = arith.constant 0 : i32
    return %c0_i32, %c0_i32_0 : i32, i32
  }
  func.func @transform_6(%arg0: i32) -> (i32, i32) {
    %c0_i32 = arith.constant 0 : i32
    %c0_i32_0 = arith.constant 0 : i32
    %c0_i32_1 = arith.constant 0 : i32
    return %c0_i32, %c0_i32_0 : i32, i32
  }
  func.func @transform_7(%arg0: i32) -> (i32, i32) {
    %c0_i32 = arith.constant 0 : i32
    %c0_i32_0 = arith.constant 0 : i32
    return %c0_i32, %arg0 : i32, i32
  }
}

</mosaic_0001>

<llo_original>
// kernel: tpu_custom_call.1
$region0: #{tpu_custom_call.1}
  #allocation0 [shape = 'u32[]', space=smem, size = 0x4, offset = 0x4, fixed_abs, tag = 'smem constant byte address 0x4 - core index']
  #allocation1 [shape = 'u32[144,128]{1,0:T(1,128)}', space=vmem, size = 0x12000, scoped, tag = 'internal scratch']
  %s0 = inlined_call_operand.vmem [shape: f32[16,32], index: 0, kind: input, shape index: {}]
  %s1 = inlined_call_operand.vmem [shape: bf16[32,32], index: 1, kind: input, shape index: {}]
  %s2 = inlined_call_operand.vmem [shape: f32[32,16], index: 2, kind: input, shape index: {}]
  %s3 = inlined_call_operand.vmem [shape: bf16[32,32], index: 3, kind: input, shape index: {}]
  %s4 = inlined_call_operand.vmem [shape: f32[32,16], index: 4, kind: input, shape index: {}]
  %s5 = inlined_call_operand.vmem [shape: bf16[1,32], index: 5, kind: input, shape index: {}]
  %s6 = inlined_call_operand.vmem [shape: f32[1,16], index: 6, kind: input, shape index: {}]
  %s7 = inlined_call_operand.hbm [shape: f32[1,16], index: 7, kind: output, shape index: {}]
  %s8 = sld [smem:[#allocation0]]
  $region38: #{tpu_custom_call.1} parent=0
    _
  %s10 = ssub.s32 1, %s8
  %s11 = scalar_select 0, %s10, %s8
  $region1: #{tpu_custom_call.1} parent=0
    #allocation2 [shape = 'u8[512]{0}', space=vmem, size = 0x400, scoped, tag = 'output window, operand 0, single buffered']
    #allocation3 [shape = 's32[1]{0}', space=sflag, size = 0x4, scoped, tag = 'scoped memory for tpu_custom_call.1']
    %12 = vsyncpa [#allocation3], 0
    // Predicated region
    $region2: #{tpu_custom_call.1} parent=1 // pred_check
      _
    $region3: #{tpu_custom_call.1} parent=1 // pred_check_branch
      %14 = sbr.rel (0) target = $region5
    $region4: #{tpu_custom_call.1} parent=1 // pred_region
      _
    $region5: #{tpu_custom_call.1} parent=1 // pred_fallthru
      _
    // Predicated region
    $region6: #{tpu_custom_call.1} parent=1 // pred_check
      _
    $region7: #{tpu_custom_call.1} parent=1 // pred_check_branch
      %16 = sbr.rel (0) target = $region9
    $region8: #{tpu_custom_call.1} parent=1 // pred_region
      _
    $region9: #{tpu_custom_call.1} parent=1 // pred_fallthru
      _
    // Predicated region
    $region10: #{tpu_custom_call.1} parent=1 // pred_check
      _
    $region11: #{tpu_custom_call.1} parent=1 // pred_check_branch
      %18 = sbr.rel (0) target = $region13
    $region12: #{tpu_custom_call.1} parent=1 // pred_region
      _
    $region13: #{tpu_custom_call.1} parent=1 // pred_fallthru
      _
    // Predicated region
    $region14: #{tpu_custom_call.1} parent=1 // pred_check
      _
    $region15: #{tpu_custom_call.1} parent=1 // pred_check_branch
      %20 = sbr.rel (0) target = $region17
    $region16: #{tpu_custom_call.1} parent=1 // pred_region
      _
    $region17: #{tpu_custom_call.1} parent=1 // pred_fallthru
      _
    // Predicated region
    $region18: #{tpu_custom_call.1} parent=1 // pred_check
      _
    $region19: #{tpu_custom_call.1} parent=1 // pred_check_branch
      %22 = sbr.rel (0) target = $region21
    $region20: #{tpu_custom_call.1} parent=1 // pred_region
      _
    $region21: #{tpu_custom_call.1} parent=1 // pred_fallthru
      _
    // Predicated region
    $region22: #{tpu_custom_call.1} parent=1 // pred_check
      _
    $region23: #{tpu_custom_call.1} parent=1 // pred_check_branch
      %24 = sbr.rel (0) target = $region25
    $region24: #{tpu_custom_call.1} parent=1 // pred_region
      _
    $region25: #{tpu_custom_call.1} parent=1 // pred_fallthru
      _
    // Predicated region
    $region26: #{tpu_custom_call.1} parent=1 // pred_check
      _
    $region27: #{tpu_custom_call.1} parent=1 // pred_check_branch
      %26 = sbr.rel (0) target = $region29
    $region28: #{tpu_custom_call.1} parent=1 // pred_region
      _
    $region29: #{tpu_custom_call.1} parent=1 // pred_fallthru
      _
    %v28 = vld [vmem:[%s0] sm:$0xff]
    %v29 = vld [vmem:[%s0 + $0x8] sm:$0xff]
    %v30 = vpack.c.bf16 %v29, %v28
    %v31 = vld [vmem:[%s1] sm:$0xf]
    %v32 = vld [vmem:[%s1 + $0x4] sm:$0xf]
    %v33 = vld [vmem:[%s1 + $0x8] sm:$0xf]
    %v34 = vld [vmem:[%s1 + $0xc] sm:$0xf]
    %v35 = vld [vmem:[%s2] sm:$0xff]
    %v36 = vld [vmem:[%s2 + $0x8] sm:$0xff]
    %v37 = vld [vmem:[%s2 + $0x10] sm:$0xff]
    %v38 = vld [vmem:[%s2 + $0x18] sm:$0xff]
    %v43 = vunpack.c.l.b16 %v31
    %v44 = vunpack.c.l.b16 %v32
    %v45 = vunpack.c.l.b16 %v33
    %v46 = vunpack.c.l.b16 %v34
    %v47 = vpack.c.b16 %v44, %v43
    %v48 = vpack.c.b16 %v46, %v45
    %vm49 = vcmask 261120
    %v51 = vsel %vm49, %v47, 0
    %v54 = vsel %vm49, %v48, 0
    %v57 = vsel %vm49, %v30, 0
    %59 = vmatprep.subr.bf16.mxu0 0
    %60 = vmatpush1.bf16.xpose.msra.mxu0 %v57
    %61 = vmatprep.subr.bf16.mxu0 0
    %62 = vmatpush1.bf16.xpose.msra.mxu0 0
    %63 = vmatprep.subr.bf16.mxu0 0
    %64 = vmatpush1.bf16.xpose.msra.mxu0 0
    %65 = vmatprep.subr.bf16.mxu0 0
    %66 = vmatpush1.bf16.xpose.msra.mxu0 0
    %67 = vmatprep.subr.bf16.mxu0 0
    %68 = vmatpush1.bf16.xpose.msra.mxu0 0
    %69 = vmatprep.subr.bf16.mxu0 0
    %70 = vmatpush1.bf16.xpose.msra.mxu0 0
    %71 = vmatprep.subr.bf16.mxu0 0
    %72 = vmatpush1.bf16.xpose.msra.mxu0 0
    %73 = vmatprep.subr.bf16.mxu0 0
    %74 = vmatpush1.bf16.xpose.msra.mxu0 0
    %75 = vmatprep.subr.bf16.mxu0 0
    %76 = vmatpush1.bf16.xpose.msra.mxu0 0
    %77 = vmatprep.subr.bf16.mxu0 0
    %78 = vmatpush1.bf16.xpose.msra.mxu0 0
    %79 = vmatprep.subr.bf16.mxu0 0
    %80 = vmatpush1.bf16.xpose.msra.mxu0 0
    %81 = vmatprep.subr.bf16.mxu0 0
    %82 = vmatpush1.bf16.xpose.msra.mxu0 0
    %83 = vmatprep.subr.bf16.mxu0 0
    %84 = vmatpush1.bf16.xpose.msra.mxu0 0
    %85 = vmatprep.subr.bf16.mxu0 0
    %86 = vmatpush1.bf16.xpose.msra.mxu0 0
    %87 = vmatprep.subr.bf16.mxu0 0
    %88 = vmatpush1.bf16.xpose.msra.mxu0 0
    %89 = vmatprep.subr.bf16.mxu0 0
    %90 = vmatpush1.bf16.xpose.msra.mxu0 0
    %91 = vmatprep.mubr.bf16.mxu0 0
    %92 = vmatmul.mubr.bf16.gmra.mrb[0].mxu0 %v51
    %v93 = vpop.f32.mrb[0].mxu0
    %v94 = vadd.f32 %v35, %v93
    %v95 = vpop.f32.mrb[0].mxu0
    %v96 = vpop.f32.mrb[0].mxu0
    %v97 = vadd.f32 %v36, %v96
    %v98 = vpop.f32.mrb[0].mxu0
    %99 = vmatprep.mubr.bf16.mxu0 0
    %100 = vmatmul.mubr.bf16.gmra.mrb[0].mxu0 %v54
    %v101 = vpop.f32.mrb[0].mxu0
    %v102 = vadd.f32 %v37, %v101
    %v103 = vpop.f32.mrb[0].mxu0
    %v104 = vpop.f32.mrb[0].mxu0
    %v105 = vadd.f32 %v38, %v104
    %v106 = vpop.f32.mrb[0].mxu0
    %107 = vdwg.mxu0
    %v108 = vmax.f32 %v94, 0.0
    %v109 = vmax.f32 %v97, 0.0
    %v110 = vmax.f32 %v102, 0.0
    %v111 = vmax.f32 %v105, 0.0
    %v112 = vld [vmem:[%s3] sm:$0xf]
    %v113 = vld [vmem:[%s3 + $0x4] sm:$0xf]
    %v114 = vld [vmem:[%s3 + $0x8] sm:$0xf]
    %v115 = vld [vmem:[%s3 + $0xc] sm:$0xf]
    %v116 = vpack.c.bf16 %v109, %v108
    %v117 = vpack.c.bf16 %v111, %v110
    %v118 = vld [vmem:[%s4] sm:$0xff]
    %v119 = vld [vmem:[%s4 + $0x8] sm:$0xff]
    %v120 = vld [vmem:[%s4 + $0x10] sm:$0xff]
    %v121 = vld [vmem:[%s4 + $0x18] sm:$0xff]
    %v126 = vunpack.c.l.b16 %v112
    %v127 = vunpack.c.l.b16 %v113
    %v128 = vunpack.c.l.b16 %v114
    %v129 = vunpack.c.l.b16 %v115
    %v130 = vpack.c.b16 %v127, %v126
    %v131 = vpack.c.b16 %v129, %v128
    %v133 = vsel %vm49, %v130, 0
    %v136 = vsel %vm49, %v131, 0
    %138 = vmatprep.subr.bf16.mxu0 0
    %139 = vmatpush1.bf16.msra.mxu0 %v116
    %140 = vmatprep.subr.bf16.mxu0 0
    %141 = vmatpush1.bf16.msra.mxu0 %v117
    %142 = vmatprep.subr.bf16.mxu0 0
    %143 = vmatpush1.bf16.msra.mxu0 0
    %144 = vmatprep.subr.bf16.mxu0 0
    %145 = vmatpush1.bf16.msra.mxu0 0
    %146 = vmatprep.subr.bf16.mxu0 0
    %147 = vmatpush1.bf16.msra.mxu0 0
    %148 = vmatprep.subr.bf16.mxu0 0
    %149 = vmatpush1.bf16.msra.mxu0 0
    %150 = vmatprep.subr.bf16.mxu0 0
    %151 = vmatpush1.bf16.msra.mxu0 0
    %152 = vmatprep.subr.bf16.mxu0 0
    %153 = vmatpush1.bf16.msra.mxu0 0
    %154 = vmatprep.subr.bf16.mxu0 0
    %155 = vmatpush1.bf16.msra.mxu0 0
    %156 = vmatprep.subr.bf16.mxu0 0
    %157 = vmatpush1.bf16.msra.mxu0 0
    %158 = vmatprep.subr.bf16.mxu0 0
    %159 = vmatpush1.bf16.msra.mxu0 0
    %160 = vmatprep.subr.bf16.mxu0 0
    %161 = vmatpush1.bf16.msra.mxu0 0
    %162 = vmatprep.subr.bf16.mxu0 0
    %163 = vmatpush1.bf16.msra.mxu0 0
    %164 = vmatprep.subr.bf16.mxu0 0
    %165 = vmatpush1.bf16.msra.mxu0 0
    %166 = vmatprep.subr.bf16.mxu0 0
    %167 = vmatpush1.bf16.msra.mxu0 0
    %168 = vmatprep.subr.bf16.mxu0 0
    %169 = vmatpush1.bf16.msra.mxu0 0
    %170 = vmatprep.mubr.bf16.mxu0 0
    %171 = vmatmul.mubr.bf16.gmra.mrb[0].mxu0 %v133
    %v172 = vpop.f32.mrb[0].mxu0
    %v173 = vadd.f32 %v118, %v172
    %v174 = vpop.f32.mrb[0].mxu0
    %v175 = vpop.f32.mrb[0].mxu0
    %v176 = vadd.f32 %v119, %v175
    %v177 = vpop.f32.mrb[0].mxu0
    %178 = vmatprep.mubr.bf16.mxu0 0
    %179 = vmatmul.mubr.bf16.gmra.mrb[0].mxu0 %v136
    %v180 = vpop.f32.mrb[0].mxu0
    %v181 = vadd.f32 %v120, %v180
    %v182 = vpop.f32.mrb[0].mxu0
    %v183 = vpop.f32.mrb[0].mxu0
    %v184 = vadd.f32 %v121, %v183
    %v185 = vpop.f32.mrb[0].mxu0
    %186 = vdwg.mxu0
    %v187 = vmax.f32 %v173, 0.0
    %v188 = vmax.f32 %v176, 0.0
    %v189 = vmax.f32 %v181, 0.0
    %v190 = vmax.f32 %v184, 0.0
    %v191 = vld [vmem:[%s5] sm:$0x1]
    %v192 = vpack.c.bf16 %v188, %v187
    %v193 = vpack.c.bf16 %v190, %v189
    %v194 = vld [vmem:[%s6] sm:$0x1]
    %v196 = vsel %vm49, %v191, 0
    %198 = vmatprep.subr.bf16.mxu0 0
    %199 = vmatpush1.bf16.msra.mxu0 %v192
    %200 = vmatprep.subr.bf16.mxu0 0
    %201 = vmatpush1.bf16.msra.mxu0 %v193
    %202 = vmatprep.subr.bf16.mxu0 0
    %203 = vmatpush1.bf16.msra.mxu0 0
    %204 = vmatprep.subr.bf16.mxu0 0
    %205 = vmatpush1.bf16.msra.mxu0 0
    %206 = vmatprep.subr.bf16.mxu0 0
    %207 = vmatpush1.bf16.msra.mxu0 0
    %208 = vmatprep.subr.bf16.mxu0 0
    %209 = vmatpush1.bf16.msra.mxu0 0
    %210 = vmatprep.subr.bf16.mxu0 0
    %211 = vmatpush1.bf16.msra.mxu0 0
    %212 = vmatprep.subr.bf16.mxu0 0
    %213 = vmatpush1.bf16.msra.mxu0 0
    %214 = vmatprep.subr.bf16.mxu0 0
    %215 = vmatpush1.bf16.msra.mxu0 0
    %216 = vmatprep.subr.bf16.mxu0 0
    %217 = vmatpush1.bf16.msra.mxu0 0
    %218 = vmatprep.subr.bf16.mxu0 0
    %219 = vmatpush1.bf16.msra.mxu0 0
    %220 = vmatprep.subr.bf16.mxu0 0
    %221 = vmatpush1.bf16.msra.mxu0 0
    %222 = vmatprep.subr.bf16.mxu0 0
    %223 = vmatpush1.bf16.msra.mxu0 0
    %224 = vmatprep.subr.bf16.mxu0 0
    %225 = vmatpush1.bf16.msra.mxu0 0
    %226 = vmatprep.subr.bf16.mxu0 0
    %227 = vmatpush1.bf16.msra.mxu0 0
    %228 = vmatprep.subr.bf16.mxu0 0
    %229 = vmatpush1.bf16.msra.mxu0 0
    %230 = vmatprep.mubr.bf16.mxu0 0
    %231 = vmatmul.mubr.bf16.gmra.mrb[0].mxu0 %v196
    %v232 = vpop.f32.mrb[0].mxu0
    %v233 = vadd.f32 %v194, %v232
    %v234 = vpop.f32.mrb[0].mxu0
    %v235 = vpop.f32.mrb[0].mxu0
    %v236 = vpop.f32.mrb[0].mxu0
    %237 = vdwg.mxu0
    %v238 = vxor.u32 %v233, 2147483648
    %v239 = vmul.f32 %v238, 1.442695
    %v240 = vpow.pop %v239
    %v241 = vadd.f32 %v240, 1.0
    %v242 = vrcp.pop %v241
    %v243 = vmul.f32 1.0, %v242
    %vm244 = vcmask 122880
    %245 = vst.msk [vmem:[#allocation2] sm:$0x1] %vm244, %v243
    // Predicated region
    $region30: #{tpu_custom_call.1} parent=1 // pred_check
      _
    $region31: #{tpu_custom_call.1} parent=1 // pred_check_branch
      %247 = sbr.rel (0) target = $region33
    $region32: #{tpu_custom_call.1} parent=1 // pred_region
      %s249 = ssub.s32 16, 16
      %250 = vsyncadd [#allocation3], %s249
      %s252 = sshll.u32 [#allocation2], 4
      %s253 = int_to_ptr.vmem [resolvable:$true] %s252
      %255 = dma.vmem_to_hbm [thread:$0]  %s253, 16, %s7, [#allocation3]
    $region33: #{tpu_custom_call.1} parent=1 // pred_fallthru
      _
    // Predicated region
    $region34: #{tpu_custom_call.1} parent=1 // pred_check
      _
    $region35: #{tpu_custom_call.1} parent=1 // pred_check_branch
      %257 = sbr.rel (0) target = $region37
    $region36: #{tpu_custom_call.1} parent=1 // pred_region
      %258 = dma.done [#allocation3], 16
    $region37: #{tpu_custom_call.1} parent=1 // pred_fallthru
      _
    %259 = vsyncpa [#allocation3], 1

</llo_original>
